<compile_context>
chip_gen: v7x
topology: tpu7x:2x2x1
jax: 0.10.0
libtpu: 0.0.40
codegen_flags: <defaults>
</compile_context>

<pallas_src>
import jax
import jax.numpy as jnp
from jax.experimental import pallas as pl
from jax.experimental.pallas import tpu as pltpu


def _round_up(x, m):
    return (x + m - 1) // m * m


def _pad_last(a, to):
    pad = to - a.shape[-1]
    if pad == 0:
        return a
    return jnp.pad(a, [(0, 0)] * (a.ndim - 1) + [(0, pad)])


def _pad2(a, rows, cols):
    return jnp.pad(a, ((0, rows - a.shape[0]), (0, cols - a.shape[1])))


def _make_kernel(Lp, Dp, Hp):
    """Kernel factory; Lp/Dp/Hp are the 128-aligned padded widths of the
    PreFC output, FC1 output and LSTM hidden state."""
    # Side-buffer segment offsets (each a multiple of 128 -> aligned views).
    o_bpre = 0
    o_b1 = Lp
    o_blstm = Lp + Dp
    o_w3 = Lp + Dp + 4 * Hp
    o_b3 = Lp + Dp + 5 * Hp

    def kernel(obs_acts_ref, laser_ref, hc0_ref,
               w_pre_ref, w1_oa_ref, w1_las_ref,
               w_ih_ref, w_hh_ref, side_ref, q_ref):
        f32 = jnp.float32
        bf16 = jnp.bfloat16

        b_pre = side_ref[:, o_bpre:o_bpre + Lp]
        b1 = side_ref[:, o_b1:o_b1 + Dp]
        b_lstm = side_ref[:, o_blstm:o_blstm + 4 * Hp]
        w3 = side_ref[:, o_w3:o_w3 + Hp]
        b3 = side_ref[:, o_b3:o_b3 + 1]

        # PreFC + ReLU.  bf16 MXU operands, f32 accumulation & elementwise.
        # Padded output columns are exactly 0 (zero weight cols, zero bias).
        pre = jnp.dot(laser_ref[...], w_pre_ref[...], preferred_element_type=f32)
        pre = jnp.maximum(pre + b_pre, 0.0)

        # FC1 over cat([obs, pre, acts], 1) as a 2-way split matmul
        # (obs & acts pre-concatenated in the wrapper), single bias add, ReLU.
        x = (jnp.dot(obs_acts_ref[...], w1_oa_ref[...], preferred_element_type=f32)
             + jnp.dot(pre.astype(bf16), w1_las_ref[...], preferred_element_type=f32)
             + b1)
        x = jnp.maximum(x, 0.0)

        # Single-step LSTM cell (seq_len == 1).  PyTorch gate order: i, f, g, o.
        # Each gate block is zero-padded to Hp lanes; padded gate pre-acts are 0
        # and padded c0 is 0 => padded c_new = 0, padded h_new = 0 (inert).
        h0 = hc0_ref[:, :Hp].astype(bf16)
        c0 = hc0_ref[:, Hp:]
        gates = (jnp.dot(x.astype(bf16), w_ih_ref[...], preferred_element_type=f32)
                 + jnp.dot(h0, w_hh_ref[...], preferred_element_type=f32)
                 + b_lstm)
        i_g = jax.nn.sigmoid(gates[:, 0 * Hp:1 * Hp])
        f_g = jax.nn.sigmoid(gates[:, 1 * Hp:2 * Hp])
        g_g = jnp.tanh(gates[:, 2 * Hp:3 * Hp])
        o_g = jax.nn.sigmoid(gates[:, 3 * Hp:4 * Hp])
        c_new = f_g * c0 + i_g * g_g
        h_new = o_g * jnp.tanh(c_new)

        # FC3 (out_features == 1): VPU multiply + XLU lane reduction instead of
        # a near-empty 1-column MXU matmul (padded columns of w3 are zero).
        q_ref[...] = jnp.sum(h_new * w3, axis=-1, keepdims=True) + b3

    return kernel


def init_params(key, n_agent, dim_observation, dim_action, dim_laser,
                las_output, hidden_layer, second_hidden_layer):
    """Float32, PyTorch-equivalent parameters, stored transposed as (in, out)."""
    obs_dim = dim_observation * n_agent
    act_dim = dim_action * n_agent
    las_dim = dim_laser * n_agent
    las_out_dim = las_output * n_agent
    hidden_dim = hidden_layer * n_agent
    second_hidden_dim = second_hidden_layer * n_agent

    def lin(k, fan_in, fan_out):
        bound = 1.0 / float(fan_in) ** 0.5
        kw, kb = jax.random.split(k)
        w = jax.random.uniform(kw, (fan_in, fan_out), jnp.float32, -bound, bound)
        b = jax.random.uniform(kb, (1, fan_out), jnp.float32, -bound, bound)
        return w, b

    ks = jax.random.split(key, 5)
    w_pre, b_pre = lin(ks[0], las_dim, las_out_dim)
    w1, b1 = lin(ks[1], obs_dim + las_out_dim + act_dim, hidden_dim)
    w_ih, b_ih = lin(ks[2], hidden_dim, 4 * second_hidden_dim)
    w_hh, b_hh = lin(ks[3], second_hidden_dim, 4 * second_hidden_dim)
    w3, b3 = lin(ks[4], second_hidden_dim, 1)

    params = dict(w_pre=w_pre, b_pre=b_pre, w1=w1, b1=b1,
                  w_ih=w_ih, w_hh=w_hh, b_ih=b_ih, b_hh=b_hh,
                  w3=w3, b3=b3)
    dims = dict(obs_dim=obs_dim, act_dim=act_dim, las_dim=las_dim,
                las_out_dim=las_out_dim, hidden_dim=hidden_dim,
                second_hidden_dim=second_hidden_dim)
    return params, dims


def pack_params(p, dims):
    """Kernel layout: bf16 weights with 128-lane-aligned zero padding of every
    output width (PreFC, FC1, per-gate LSTM blocks) plus matching zero input
    rows downstream, and ALL small f32 side tensors (b_pre, b1, folded LSTM
    bias, w3, b3) packed into one 128-lane-segmented buffer.  Padding is
    mathematically inert (padded activations are exactly 0)."""
    bf16 = jnp.bfloat16
    obs_dim = dims["obs_dim"]
    las_dim = dims["las_dim"]
    las_out = dims["las_out_dim"]
    hid = dims["hidden_dim"]
    H = dims["second_hidden_dim"]
    Lp = _round_up(las_out, 128)
    Dp = _round_up(hid, 128)
    Hp = _round_up(H, 128)

    w1 = p["w1"]
    w1_oa = jnp.concatenate([w1[:obs_dim], w1[obs_dim + las_out:]], axis=0)
    w1_las = w1[obs_dim:obs_dim + las_out]

    def pad_gate_cols(a):        # (..., 4H) -> (..., 4Hp), per-gate zero pad
        return jnp.concatenate(
            [_pad_last(a[..., g * H:(g + 1) * H], Hp) for g in range(4)],
            axis=-1)

    packed = dict(
        w_pre=_pad2(p["w_pre"], las_dim, Lp).astype(bf16),              # (las, Lp)
        w1_oa=_pad2(w1_oa, w1_oa.shape[0], Dp).astype(bf16),            # (oa,  Dp)
        w1_las=_pad2(w1_las, Lp, Dp).astype(bf16),                      # (Lp,  Dp)
        w_ih=_pad2(pad_gate_cols(p["w_ih"]), Dp, 4 * Hp).astype(bf16),  # (Dp, 4Hp)
        w_hh=_pad2(pad_gate_cols(p["w_hh"]), Hp, 4 * Hp).astype(bf16),  # (Hp, 4Hp)
        side=jnp.concatenate(
            [_pad_last(p["b_pre"], Lp),
             _pad_last(p["b1"], Dp),
             pad_gate_cols(p["b_ih"] + p["b_hh"]),
             _pad_last(p["w3"].T, Hp),
             _pad_last(p["b3"], 128)],
            axis=-1).astype(jnp.float32),                  # (1, Lp+Dp+5Hp+128)
    )
    pdims = dict(Lp=Lp, Dp=Dp, Hp=Hp)
    return packed, pdims


def _pick_tb(B, override=None):
    """Batch tile: 128 on v5e (4x128 MXU), up to 256 on v6e/v7x (2x256 MXU);
    on v7x pick TB so the 'parallel' batch grid has >= 4 steps and both
    TensorCores get work.  Small batches stay a single full-extent block."""
    if override is not None:
        return override
    kind = ""
    try:
        kind = jax.devices()[0].device_kind.lower()
    except Exception:
        pass
    cap = 128 if "v5" in kind else 256
    two_tc = ("v7" in kind) or ("7x" in kind)
    if B <= cap and not (two_tc and B >= 64):
        return B                               # one full-extent block
    if two_tc:
        tb = _round_up(-(-B // 4), 16)
    else:
        tb = cap
    return max(16, min(tb, cap))


def critic_forward(obs, acts, laser, hidden, packed, pdims, tb=None):
    """obs:(B,obs_dim) acts:(B,act_dim) laser:(B,las_dim)
    hidden = (h0, c0), each (1, B, second_hidden_dim) as in nn.LSTM.

    Stack multiple critic evaluations (per-agent / per-timestep) into one call
    with a larger B whenever possible: at small B this op is entirely
    launch/DMA-overhead bound and batching is the dominant win."""
    bf16 = jnp.bfloat16
    h0, c0 = hidden
    B = obs.shape[0]
    H = h0.shape[-1]
    Lp, Dp, Hp = pdims["Lp"], pdims["Dp"], pdims["Hp"]
    # num_layers == 1 and seq_len == 1 are assumed by this forward pass.
    assert h0.shape == (1, B, H) and c0.shape == (1, B, H)

    # Row (batch) operands.  bf16 MXU LHS activations (keep f32 if TD-target
    # precision matters — overhead-bound either way); h0|c0 merged into one
    # f32 buffer (h0 cast to bf16 in-kernel) to drop an operand.
    obs_acts = jnp.concatenate([obs, acts], axis=1).astype(bf16)
    laser_b = laser.astype(bf16)
    hc0 = jnp.concatenate(
        [_pad_last(h0.reshape(B, H), Hp), _pad_last(c0.reshape(B, H), Hp)],
        axis=1).astype(jnp.float32)                        # (B, 2*Hp)

    TB = _pick_tb(B, tb)
    Bp = _round_up(B, TB)
    if Bp != B:
        # Zero-pad the batch to a TB multiple so no grid block reads
        # out-of-range rows; padded rows are sliced away below.
        pad = lambda a: jnp.pad(a, ((0, Bp - B), (0, 0)))
        obs_acts, laser_b, hc0 = pad(obs_acts), pad(laser_b), pad(hc0)

    row_inputs = (obs_acts, laser_b, hc0)
    weights = (packed["w_pre"], packed["w1_oa"], packed["w1_las"],
               packed["w_ih"], packed["w_hh"], packed["side"])

    def row_spec(a):
        return pl.BlockSpec((TB, a.shape[1]), lambda i: (i, 0))

    def weight_spec(a):
        # Constant block index across the batch grid -> weights stay
        # VMEM-resident (single DMA) for all grid steps.
        return pl.BlockSpec(a.shape, lambda i: (0, 0))

    in_specs = ([row_spec(a) for a in row_inputs]
                + [weight_spec(a) for a in weights])

    las_dim = laser.shape[1]
    oa_dim = obs_acts.shape[1]
    flops = 2 * Bp * (las_dim * Lp + oa_dim * Dp + Lp * Dp
                      + Dp * 4 * Hp + Hp * 4 * Hp + Hp)
    bytes_accessed = (sum(int(a.size) * a.dtype.itemsize
                          for a in row_inputs + weights) + Bp * 4)

    q = pl.pallas_call(
        _make_kernel(Lp, Dp, Hp),
        out_shape=jax.ShapeDtypeStruct((Bp, 1), jnp.float32),
        grid=(Bp // TB,),
        in_specs=in_specs,
        out_specs=pl.BlockSpec((TB, 1), lambda i: (i, 0)),
        compiler_params=pltpu.CompilerParams(
            dimension_semantics=("parallel",)),
        cost_estimate=pl.CostEstimate(
            flops=int(flops),
            transcendentals=int(5 * Bp * Hp),
            bytes_accessed=int(bytes_accessed)),
    )(*row_inputs, *weights)
    return q[:B]


def critic_ref(obs, acts, laser, h0, c0, p):
    """Pure-JAX f32 reference matching PyTorch Critic.forward semantics."""
    pre = jax.nn.relu(laser @ p["w_pre"] + p["b_pre"])
    comb = jnp.concatenate([obs, pre, acts], axis=1)
    x = jax.nn.relu(comb @ p["w1"] + p["b1"])
    gates = x @ p["w_ih"] + h0 @ p["w_hh"] + p["b_ih"] + p["b_hh"]
    H = c0.shape[-1]
    i = jax.nn.sigmoid(gates[:, :H])
    f = jax.nn.sigmoid(gates[:, H:2 * H])
    g = jnp.tanh(gates[:, 2 * H:3 * H])
    o = jax.nn.sigmoid(gates[:, 3 * H:])
    c = f * c0 + i * g
    h = o * jnp.tanh(c)
    return h @ p["w3"] + p["b3"]


if __name__ == "__main__":
    # Small, forward-consistent configuration (3 agents as in the 3vs1 setup).
    n_agent = 3
    dim_observation = 8
    dim_action = 2
    dim_laser = 16
    las_output = 8
    hidden_layer = 16
    second_hidden_layer = 16

    key = jax.random.PRNGKey(0)
    kp, kd = jax.random.split(key)

    params, dims = init_params(kp, n_agent, dim_observation, dim_action,
                               dim_laser, las_output, hidden_layer,
                               second_hidden_layer)
    packed, pdims = pack_params(params, dims)

    def make_batch(k, B):
        k1, k2, k3, k4, k5 = jax.random.split(k, 5)
        obs = jax.random.normal(k1, (B, dims["obs_dim"]), jnp.float32)
        acts = jax.random.normal(k2, (B, dims["act_dim"]), jnp.float32)
        laser = jax.random.normal(k3, (B, dims["las_dim"]), jnp.float32)
        h0 = jax.random.normal(k4, (1, B, dims["second_hidden_dim"]), jnp.float32)
        c0 = jax.random.normal(k5, (1, B, dims["second_hidden_dim"]), jnp.float32)
        return obs, acts, laser, h0, c0

    def check(batch, tb=None):
        obs, acts, laser, h0, c0 = batch
        B = obs.shape[0]
        q = critic_forward(obs, acts, laser, (h0, c0), packed, pdims, tb=tb)
        q = jax.block_until_ready(q)
        q_ref = critic_ref(obs, acts, laser,
                           h0.reshape(B, -1), c0.reshape(B, -1), params)
        assert q.shape == (B, 1)
        max_err = float(jnp.max(jnp.abs(q - q_ref)))
        # bf16 MXU operands vs. full-f32 reference -> loose-but-meaningful bound.
        assert max_err < 5e-2, (max_err, q, q_ref)

    kb1, kb2 = jax.random.split(kd)

    # Single-evaluation batch (B=8): one full-extent block.
    check(make_batch(kb1, 8))

    # Stacked evaluations: in the MADDPG loop, batch per-agent / per-timestep
    # critic calls into ONE pallas_call to amortize the fixed launch + DMA
    # setup (the dominant cost at these shapes).  B=40 with a forced TB=16 also
    # exercises the tiled, batch-padded multi-step grid path.
    check(make_batch(kb2, 40), tb=16)
    # TODO(synk): this forward (like the PyTorch module) discards the new LSTM
    # state; a recurrent rollout that reuses (h, c) needs them emitted too.

    print("KERNEL_OK")
</pallas_src>

<mosaic_0001>
module attributes {stable_mosaic.version = 11 : i64} {
  func.func @kernel(%arg0: i32, %arg1: memref<8x30xbf16, #tpu.memory_space<vmem>>, %arg2: memref<8x48xbf16, #tpu.memory_space<vmem>>, %arg3: memref<8x256xf32, #tpu.memory_space<vmem>>, %arg4: memref<48x128xbf16, #tpu.memory_space<vmem>>, %arg5: memref<30x128xbf16, #tpu.memory_space<vmem>>, %arg6: memref<128x128xbf16, #tpu.memory_space<vmem>>, %arg7: memref<128x512xbf16, #tpu.memory_space<vmem>>, %arg8: memref<128x512xbf16, #tpu.memory_space<vmem>>, %arg9: memref<1x1024xf32, #tpu.memory_space<vmem>>, %arg10: memref<8x1xf32, #tpu.memory_space<vmem>>) attributes {dimension_semantics = [#tpu.dimension_semantics<parallel>], iteration_bounds = array<i64: 1>, scalar_prefetch = 0 : i64, scratch_operands = 0 : i64, tpu.core_type = #tpu.core_type<tc>, window_params = [{transform_indices = @transform_0, window_bounds = array<i64: 8, 30>}, {transform_indices = @transform_1, window_bounds = array<i64: 8, 48>}, {transform_indices = @transform_2, window_bounds = array<i64: 8, 256>}, {pipeline_mode = #tpu.pipeline_mode<synchronous>, transform_indices = @transform_3, window_bounds = array<i64: 48, 128>}, {pipeline_mode = #tpu.pipeline_mode<synchronous>, transform_indices = @transform_4, window_bounds = array<i64: 30, 128>}, {pipeline_mode = #tpu.pipeline_mode<synchronous>, transform_indices = @transform_5, window_bounds = array<i64: 128, 128>}, {pipeline_mode = #tpu.pipeline_mode<synchronous>, transform_indices = @transform_6, window_bounds = array<i64: 128, 512>}, {pipeline_mode = #tpu.pipeline_mode<synchronous>, transform_indices = @transform_7, window_bounds = array<i64: 128, 512>}, {pipeline_mode = #tpu.pipeline_mode<synchronous>, transform_indices = @transform_8, window_bounds = array<i64: 1, 1024>}, {transform_indices = @transform_9, window_bounds = array<i64: 8, 1>}]} {
    %c0 = arith.constant 0 : index
    %c0_0 = arith.constant 0 : index
    %0 = vector.load %arg9[%c0, %c0_0] : memref<1x1024xf32, #tpu.memory_space<vmem>>, vector<1x128xf32>
    %c0_1 = arith.constant 0 : index
    %c128 = arith.constant 128 : index
    %1 = vector.load %arg9[%c0_1, %c128] : memref<1x1024xf32, #tpu.memory_space<vmem>>, vector<1x128xf32>
    %c0_2 = arith.constant 0 : index
    %c256 = arith.constant 256 : index
    %2 = vector.load %arg9[%c0_2, %c256] : memref<1x1024xf32, #tpu.memory_space<vmem>>, vector<1x512xf32>
    %c0_3 = arith.constant 0 : index
    %c768 = arith.constant 768 : index
    %3 = vector.load %arg9[%c0_3, %c768] : memref<1x1024xf32, #tpu.memory_space<vmem>>, vector<1x128xf32>
    %c0_4 = arith.constant 0 : index
    %c896 = arith.constant 896 : index
    %4 = vector.load %arg9[%c0_4, %c896] : memref<1x1024xf32, #tpu.memory_space<vmem>>, vector<1x1xf32>
    %c0_5 = arith.constant 0 : index
    %c0_6 = arith.constant 0 : index
    %5 = vector.load %arg2[%c0_5, %c0_6] : memref<8x48xbf16, #tpu.memory_space<vmem>>, vector<8x48xbf16>
    %c0_7 = arith.constant 0 : index
    %c0_8 = arith.constant 0 : index
    %6 = vector.load %arg4[%c0_7, %c0_8] : memref<48x128xbf16, #tpu.memory_space<vmem>>, vector<48x128xbf16>
    %cst = arith.constant dense<0.000000e+00> : vector<8x128xf32>
    %7 = tpu.matmul %5, %6, %cst {dimension_numbers = #tpu.dot_dimension_numbers<[1], [0], [0], [1], [0, 0, 1, 1], [], []>} : vector<8x48xbf16>, vector<48x128xbf16>, vector<8x128xf32> -> vector<8x128xf32>
    %8 = vector.broadcast %0 : vector<1x128xf32> to vector<8x128xf32>
    %9 = arith.addf %7, %8 : vector<8x128xf32>
    %cst_9 = arith.constant 0.000000e+00 : f32
    %10 = vector.broadcast %cst_9 : f32 to vector<8x128xf32>
    %11 = arith.maximumf %9, %10 : vector<8x128xf32>
    %c0_10 = arith.constant 0 : index
    %c0_11 = arith.constant 0 : index
    %12 = vector.load %arg1[%c0_10, %c0_11] : memref<8x30xbf16, #tpu.memory_space<vmem>>, vector<8x30xbf16>
    %c0_12 = arith.constant 0 : index
    %c0_13 = arith.constant 0 : index
    %13 = vector.load %arg5[%c0_12, %c0_13] : memref<30x128xbf16, #tpu.memory_space<vmem>>, vector<30x128xbf16>
    %cst_14 = arith.constant dense<0.000000e+00> : vector<8x128xf32>
    %14 = tpu.matmul %12, %13, %cst_14 {dimension_numbers = #tpu.dot_dimension_numbers<[1], [0], [0], [1], [0, 0, 1, 1], [], []>} : vector<8x30xbf16>, vector<30x128xbf16>, vector<8x128xf32> -> vector<8x128xf32>
    %15 = arith.truncf %11 : vector<8x128xf32> to vector<8x128xbf16>
    %c0_15 = arith.constant 0 : index
    %c0_16 = arith.constant 0 : index
    %16 = vector.load %arg6[%c0_15, %c0_16] : memref<128x128xbf16, #tpu.memory_space<vmem>>, vector<128x128xbf16>
    %cst_17 = arith.constant dense<0.000000e+00> : vector<8x128xf32>
    %17 = tpu.matmul %15, %16, %cst_17 {dimension_numbers = #tpu.dot_dimension_numbers<[1], [0], [0], [1], [0, 0, 1, 1], [], []>} : vector<8x128xbf16>, vector<128x128xbf16>, vector<8x128xf32> -> vector<8x128xf32>
    %18 = arith.addf %14, %17 : vector<8x128xf32>
    %19 = vector.broadcast %1 : vector<1x128xf32> to vector<8x128xf32>
    %20 = arith.addf %18, %19 : vector<8x128xf32>
    %cst_18 = arith.constant 0.000000e+00 : f32
    %21 = vector.broadcast %cst_18 : f32 to vector<8x128xf32>
    %22 = arith.maximumf %20, %21 : vector<8x128xf32>
    %c0_19 = arith.constant 0 : index
    %c0_20 = arith.constant 0 : index
    %23 = vector.load %arg3[%c0_19, %c0_20] : memref<8x256xf32, #tpu.memory_space<vmem>>, vector<8x128xf32>
    %24 = arith.truncf %23 : vector<8x128xf32> to vector<8x128xbf16>
    %c0_21 = arith.constant 0 : index
    %c128_22 = arith.constant 128 : index
    %25 = vector.load %arg3[%c0_21, %c128_22] : memref<8x256xf32, #tpu.memory_space<vmem>>, vector<8x128xf32>
    %26 = arith.truncf %22 : vector<8x128xf32> to vector<8x128xbf16>
    %c0_23 = arith.constant 0 : index
    %c0_24 = arith.constant 0 : index
    %27 = vector.load %arg7[%c0_23, %c0_24] : memref<128x512xbf16, #tpu.memory_space<vmem>>, vector<128x512xbf16>
    %cst_25 = arith.constant dense<0.000000e+00> : vector<8x512xf32>
    %28 = tpu.matmul %26, %27, %cst_25 {dimension_numbers = #tpu.dot_dimension_numbers<[1], [0], [0], [1], [0, 0, 1, 1], [], []>} : vector<8x128xbf16>, vector<128x512xbf16>, vector<8x512xf32> -> vector<8x512xf32>
    %c0_26 = arith.constant 0 : index
    %c0_27 = arith.constant 0 : index
    %29 = vector.load %arg8[%c0_26, %c0_27] : memref<128x512xbf16, #tpu.memory_space<vmem>>, vector<128x512xbf16>
    %cst_28 = arith.constant dense<0.000000e+00> : vector<8x512xf32>
    %30 = tpu.matmul %24, %29, %cst_28 {dimension_numbers = #tpu.dot_dimension_numbers<[1], [0], [0], [1], [0, 0, 1, 1], [], []>} : vector<8x128xbf16>, vector<128x512xbf16>, vector<8x512xf32> -> vector<8x512xf32>
    %31 = arith.addf %28, %30 : vector<8x512xf32>
    %32 = vector.broadcast %2 : vector<1x512xf32> to vector<8x512xf32>
    %33 = arith.addf %31, %32 : vector<8x512xf32>
    %34 = vector.extract_strided_slice %33 {offsets = [0, 0], sizes = [8, 128], strides = [1, 1]} : vector<8x512xf32> to vector<8x128xf32>
    %35 = arith.negf %34 : vector<8x128xf32>
    %36 = math.exp %35 : vector<8x128xf32>
    %cst_29 = arith.constant 1.000000e+00 : f32
    %37 = vector.broadcast %cst_29 : f32 to vector<8x128xf32>
    %38 = arith.addf %37, %36 : vector<8x128xf32>
    %39 = arith.divf %37, %38 : vector<8x128xf32>
    %40 = vector.extract_strided_slice %33 {offsets = [0, 128], sizes = [8, 128], strides = [1, 1]} : vector<8x512xf32> to vector<8x128xf32>
    %41 = arith.negf %40 : vector<8x128xf32>
    %42 = math.exp %41 : vector<8x128xf32>
    %cst_30 = arith.constant 1.000000e+00 : f32
    %43 = vector.broadcast %cst_30 : f32 to vector<8x128xf32>
    %44 = arith.addf %43, %42 : vector<8x128xf32>
    %45 = arith.divf %43, %44 : vector<8x128xf32>
    %46 = vector.extract_strided_slice %33 {offsets = [0, 256], sizes = [8, 128], strides = [1, 1]} : vector<8x512xf32> to vector<8x128xf32>
    %47 = math.tanh %46 : vector<8x128xf32>
    %48 = vector.extract_strided_slice %33 {offsets = [0, 384], sizes = [8, 128], strides = [1, 1]} : vector<8x512xf32> to vector<8x128xf32>
    %49 = arith.negf %48 : vector<8x128xf32>
    %50 = math.exp %49 : vector<8x128xf32>
    %cst_31 = arith.constant 1.000000e+00 : f32
    %51 = vector.broadcast %cst_31 : f32 to vector<8x128xf32>
    %52 = arith.addf %51, %50 : vector<8x128xf32>
    %53 = arith.divf %51, %52 : vector<8x128xf32>
    %54 = arith.mulf %45, %25 : vector<8x128xf32>
    %55 = arith.mulf %39, %47 : vector<8x128xf32>
    %56 = arith.addf %54, %55 : vector<8x128xf32>
    %57 = math.tanh %56 : vector<8x128xf32>
    %58 = arith.mulf %53, %57 : vector<8x128xf32>
    %59 = vector.broadcast %3 : vector<1x128xf32> to vector<8x128xf32>
    %60 = arith.mulf %58, %59 : vector<8x128xf32>
    %cst_32 = arith.constant dense<0.000000e+00> : vector<8xf32>
    %61 = vector.multi_reduction <add>, %60, %cst_32 [1] : vector<8x128xf32> to vector<8xf32>
    %62 = vector.shape_cast %61 : vector<8xf32> to vector<8x1xf32>
    %63 = vector.broadcast %4 : vector<1x1xf32> to vector<8x1xf32>
    %64 = arith.addf %62, %63 : vector<8x1xf32>
    %c0_33 = arith.constant 0 : index
    %c0_34 = arith.constant 0 : index
    %65 = vector.load %arg10[%c0_33, %c0_34] : memref<8x1xf32, #tpu.memory_space<vmem>>, vector<8x1xf32>
    tpu.vector_store %arg10[%c0_33, %c0_34], %64 {strides = array<i32>} : memref<8x1xf32, #tpu.memory_space<vmem>>, vector<8x1xf32>,
    return
  }
  func.func @transform_0(%arg0: i32) -> (i32, i32) {
    %c0_i32 = arith.constant 0 : i32
    %c0_i32_0 = arith.constant 0 : i32
    return %arg0, %c0_i32 : i32, i32
  }
  func.func @transform_1(%arg0: i32) -> (i32, i32) {
    %c0_i32 = arith.constant 0 : i32
    %c0_i32_0 = arith.constant 0 : i32
    return %arg0, %c0_i32 : i32, i32
  }
  func.func @transform_2(%arg0: i32) -> (i32, i32) {
    %c0_i32 = arith.constant 0 : i32
    %c0_i32_0 = arith.constant 0 : i32
    return %arg0, %c0_i32 : i32, i32
  }
  func.func @transform_3(%arg0: i32) -> (i32, i32) {
    %c0_i32 = arith.constant 0 : i32
    %c0_i32_0 = arith.constant 0 : i32
    %c0_i32_1 = arith.constant 0 : i32
    return %c0_i32, %c0_i32_0 : i32, i32
  }
  func.func @transform_4(%arg0: i32) -> (i32, i32) {
    %c0_i32 = arith.constant 0 : i32
    %c0_i32_0 = arith.constant 0 : i32
    %c0_i32_1 = arith.constant 0 : i32
    return %c0_i32, %c0_i32_0 : i32, i32
  }
  func.func @transform_5(%arg0: i32) -> (i32, i32) {
    %c0_i32 = arith.constant 0 : i32
    %c0_i32_0 = arith.constant 0 : i32
    %c0_i32_1 = arith.constant 0 : i32
    return %c0_i32, %c0_i32_0 : i32, i32
  }
  func.func @transform_6(%arg0: i32) -> (i32, i32) {
    %c0_i32 = arith.constant 0 : i32
    %c0_i32_0 = arith.constant 0 : i32
    %c0_i32_1 = arith.constant 0 : i32
    return %c0_i32, %c0_i32_0 : i32, i32
  }
  func.func @transform_7(%arg0: i32) -> (i32, i32) {
    %c0_i32 = arith.constant 0 : i32
    %c0_i32_0 = arith.constant 0 : i32
    %c0_i32_1 = arith.constant 0 : i32
    return %c0_i32, %c0_i32_0 : i32, i32
  }
  func.func @transform_8(%arg0: i32) -> (i32, i32) {
    %c0_i32 = arith.constant 0 : i32
    %c0_i32_0 = arith.constant 0 : i32
    %c0_i32_1 = arith.constant 0 : i32
    return %c0_i32, %c0_i32_0 : i32, i32
  }
  func.func @transform_9(%arg0: i32) -> (i32, i32) {
    %c0_i32 = arith.constant 0 : i32
    %c0_i32_0 = arith.constant 0 : i32
    return %arg0, %c0_i32 : i32, i32
  }
}

</mosaic_0001>

<llo_original>
// kernel: tpu_custom_call.1
$region0: #{tpu_custom_call.1}
  #allocation0 [shape = 'u32[]', space=smem, size = 0x4, offset = 0x4, fixed_abs, tag = 'smem constant byte address 0x4 - core index']
  #allocation1 [shape = 'u32[144,128]{1,0:T(1,128)}', space=vmem, size = 0x12000, scoped, tag = 'internal scratch']
  %s0 = inlined_call_operand.hbm [shape: bf16[8,30], index: 0, kind: input, shape index: {}]
  %s1 = inlined_call_operand.hbm [shape: bf16[8,48], index: 1, kind: input, shape index: {}]
  %s2 = inlined_call_operand.hbm [shape: f32[8,256], index: 2, kind: input, shape index: {}]
  %s3 = inlined_call_operand.hbm [shape: bf16[48,128], index: 3, kind: input, shape index: {}]
  %s4 = inlined_call_operand.hbm [shape: bf16[30,128], index: 4, kind: input, shape index: {}]
  %s5 = inlined_call_operand.hbm [shape: bf16[128,128], index: 5, kind: input, shape index: {}]
  %s6 = inlined_call_operand.hbm [shape: bf16[128,512], index: 6, kind: input, shape index: {}]
  %s7 = inlined_call_operand.hbm [shape: bf16[128,512], index: 7, kind: input, shape index: {}]
  %s8 = inlined_call_operand.vmem [shape: f32[1,1024], index: 8, kind: input, shape index: {}]
  %s9 = inlined_call_operand.vmem [shape: f32[8,1], index: 9, kind: output, shape index: {}]
  %s10 = sld [smem:[#allocation0]]
  $region78: #{tpu_custom_call.1} parent=0
    _
  %s12 = ssub.s32 1, %s10
  %s13 = scalar_select 0, %s12, %s10
  $region1: #{tpu_custom_call.1} parent=0
    #allocation2 [shape = 'u8[2048]{0}', space=vmem, size = 0x800, scoped, tag = 'input window, operand 0, single buffered']
    #allocation3 [shape = 's32[1]{0}', space=sflag, size = 0x4, scoped, tag = 'scoped memory for tpu_custom_call.1']
    #allocation4 [shape = 'u8[2048]{0}', space=vmem, size = 0x800, scoped, tag = 'input window, operand 1, single buffered']
    #allocation5 [shape = 's32[1]{0}', space=sflag, size = 0x4, scoped, tag = 'scoped memory for tpu_custom_call.1']
    #allocation6 [shape = 'u8[8192]{0}', space=vmem, size = 0x2000, scoped, tag = 'input window, operand 2, single buffered']
    #allocation7 [shape = 'u8[12288]{0}', space=vmem, size = 0x3000, scoped, tag = 'input window, operand 3, single buffered']
    #allocation8 [shape = 's32[1]{0}', space=sflag, size = 0x4, scoped, tag = 'scoped memory for tpu_custom_call.1']
    #allocation9 [shape = 'u8[8192]{0}', space=vmem, size = 0x2000, scoped, tag = 'input window, operand 4, single buffered']
    #allocation10 [shape = 'u8[32768]{0}', space=vmem, size = 0x8000, scoped, tag = 'input window, operand 5, single buffered']
    #allocation11 [shape = 's32[1]{0}', space=sflag, size = 0x4, scoped, tag = 'scoped memory for tpu_custom_call.1']
    #allocation12 [shape = 'u8[131072]{0}', space=vmem, size = 0x20000, scoped, tag = 'input window, operand 6, single buffered']
    #allocation13 [shape = 'u8[131072]{0}', space=vmem, size = 0x20000, scoped, tag = 'input window, operand 7, single buffered']
    #allocation14 [shape = 's32[1]{0}', space=sflag, size = 0x4, scoped, tag = 'scoped memory for tpu_custom_call.1']
    %14 = vsyncpa [#allocation3], 0
    %15 = vsyncpa [#allocation5], 0
    %16 = vsyncpa [#allocation8], 0
    %17 = vsyncpa [#allocation11], 0
    %18 = vsyncpa [#allocation14], 0
    // Predicated region
    $region2: #{tpu_custom_call.1} parent=1 // pred_check
      _
    $region3: #{tpu_custom_call.1} parent=1 // pred_check_branch
      %20 = sbr.rel (0) target = $region5
    $region4: #{tpu_custom_call.1} parent=1 // pred_region
      %s22 = ssub.s32 64, 64
      %23 = vsyncadd [#allocation3], %s22
      %s25 = sshll.u32 [#allocation2], 4
      %s26 = int_to_ptr.vmem [resolvable:$true] %s25
      %28 = dma.hbm_to_vmem [thread:$0]  %s0, 64, %s26, [#allocation3]
    $region5: #{tpu_custom_call.1} parent=1 // pred_fallthru
      _
    // Predicated region
    $region6: #{tpu_custom_call.1} parent=1 // pred_check
      _
    $region7: #{tpu_custom_call.1} parent=1 // pred_check_branch
      %30 = sbr.rel (0) target = $region9
    $region8: #{tpu_custom_call.1} parent=1 // pred_region
      %s32 = ssub.s32 64, 64
      %33 = vsyncadd [#allocation5], %s32
      %s35 = sshll.u32 [#allocation4], 4
      %s36 = int_to_ptr.vmem [resolvable:$true] %s35
      %38 = dma.hbm_to_vmem [thread:$0]  %s1, 64, %s36, [#allocation5]
    $region9: #{tpu_custom_call.1} parent=1 // pred_fallthru
      _
    // Predicated region
    $region10: #{tpu_custom_call.1} parent=1 // pred_check
      _
    $region11: #{tpu_custom_call.1} parent=1 // pred_check_branch
      %40 = sbr.rel (0) target = $region13
    $region12: #{tpu_custom_call.1} parent=1 // pred_region
      %s42 = ssub.s32 256, 256
      %43 = vsyncadd [#allocation5], %s42
      %s45 = sshll.u32 [#allocation6], 4
      %s46 = int_to_ptr.vmem [resolvable:$true] %s45
      %48 = dma.hbm_to_vmem [thread:$0]  %s2, 256, %s46, [#allocation5]
    $region13: #{tpu_custom_call.1} parent=1 // pred_fallthru
      _
    // Predicated region
    $region14: #{tpu_custom_call.1} parent=1 // pred_check
      _
    $region15: #{tpu_custom_call.1} parent=1 // pred_check_branch
      %50 = sbr.rel (0) target = $region17
    $region16: #{tpu_custom_call.1} parent=1 // pred_region
      %s52 = ssub.s32 384, 384
      %53 = vsyncadd [#allocation8], %s52
      %s54 = sshll.u32 [#allocation7], 4
      %s55 = int_to_ptr.vmem [resolvable:$true] %s54
      %60 = dma.hbm_to_vmem [thread:$0]  %s3, 384, %s55, [#allocation8], 64, 64, 4
    $region17: #{tpu_custom_call.1} parent=1 // pred_fallthru
      _
    // Predicated region
    $region18: #{tpu_custom_call.1} parent=1 // pred_check
      _
    $region19: #{tpu_custom_call.1} parent=1 // pred_check_branch
      %62 = sbr.rel (0) target = $region21
    $region20: #{tpu_custom_call.1} parent=1 // pred_region
      %s64 = ssub.s32 256, 256
      %65 = vsyncadd [#allocation8], %s64
      %s66 = sshll.u32 [#allocation9], 4
      %s67 = int_to_ptr.vmem [resolvable:$true] %s66
      %72 = dma.hbm_to_vmem [thread:$0]  %s4, 256, %s67, [#allocation8], 64, 64, 4
    $region21: #{tpu_custom_call.1} parent=1 // pred_fallthru
      _
    // Predicated region
    $region22: #{tpu_custom_call.1} parent=1 // pred_check
      _
    $region23: #{tpu_custom_call.1} parent=1 // pred_check_branch
      %74 = sbr.rel (0) target = $region25
    $region24: #{tpu_custom_call.1} parent=1 // pred_region
      %s76 = ssub.s32 1024, 1024
      %77 = vsyncadd [#allocation11], %s76
      %s78 = sshll.u32 [#allocation10], 4
      %s79 = int_to_ptr.vmem [resolvable:$true] %s78
      %84 = dma.hbm_to_vmem [thread:$0]  %s5, 1024, %s79, [#allocation11], 64, 64, 4
    $region25: #{tpu_custom_call.1} parent=1 // pred_fallthru
      _
    // Predicated region
    $region26: #{tpu_custom_call.1} parent=1 // pred_check
      _
    $region27: #{tpu_custom_call.1} parent=1 // pred_check_branch
      %86 = sbr.rel (0) target = $region29
    $region28: #{tpu_custom_call.1} parent=1 // pred_region
      %s88 = ssub.s32 4096, 4096
      %89 = vsyncadd [#allocation11], %s88
      %s90 = sshll.u32 [#allocation12], 4
      %s91 = int_to_ptr.vmem [resolvable:$true] %s90
      %96 = dma.hbm_to_vmem [thread:$0]  %s6, 4096, %s91, [#allocation11], 256, 256, 16
    $region29: #{tpu_custom_call.1} parent=1 // pred_fallthru
      _
    // Predicated region
    $region30: #{tpu_custom_call.1} parent=1 // pred_check
      _
    $region31: #{tpu_custom_call.1} parent=1 // pred_check_branch
      %98 = sbr.rel (0) target = $region33
    $region32: #{tpu_custom_call.1} parent=1 // pred_region
      %s100 = ssub.s32 4096, 4096
      %101 = vsyncadd [#allocation14], %s100
      %s102 = sshll.u32 [#allocation13], 4
      %s103 = int_to_ptr.vmem [resolvable:$true] %s102
      %108 = dma.hbm_to_vmem [thread:$0]  %s7, 4096, %s103, [#allocation14], 256, 256, 16
    $region33: #{tpu_custom_call.1} parent=1 // pred_fallthru
      _
    // Predicated region
    $region34: #{tpu_custom_call.1} parent=1 // pred_check
      _
    $region35: #{tpu_custom_call.1} parent=1 // pred_check_branch
      %110 = sbr.rel (0) target = $region37
    $region36: #{tpu_custom_call.1} parent=1 // pred_region
      _
    $region37: #{tpu_custom_call.1} parent=1 // pred_fallthru
      _
    // Predicated region
    $region38: #{tpu_custom_call.1} parent=1 // pred_check
      _
    $region39: #{tpu_custom_call.1} parent=1 // pred_check_branch
      %112 = sbr.rel (0) target = $region41
    $region40: #{tpu_custom_call.1} parent=1 // pred_region
      %113 = dma.done [#allocation3], 64
    $region41: #{tpu_custom_call.1} parent=1 // pred_fallthru
      _
    // Predicated region
    $region42: #{tpu_custom_call.1} parent=1 // pred_check
      _
    $region43: #{tpu_custom_call.1} parent=1 // pred_check_branch
      %115 = sbr.rel (0) target = $region45
    $region44: #{tpu_custom_call.1} parent=1 // pred_region
      %116 = dma.done [#allocation5], 64
    $region45: #{tpu_custom_call.1} parent=1 // pred_fallthru
      _
    // Predicated region
    $region46: #{tpu_custom_call.1} parent=1 // pred_check
      _
    $region47: #{tpu_custom_call.1} parent=1 // pred_check_branch
      %118 = sbr.rel (0) target = $region49
    $region48: #{tpu_custom_call.1} parent=1 // pred_region
      %119 = dma.done [#allocation5], 256
    $region49: #{tpu_custom_call.1} parent=1 // pred_fallthru
      _
    // Predicated region
    $region50: #{tpu_custom_call.1} parent=1 // pred_check
      _
    $region51: #{tpu_custom_call.1} parent=1 // pred_check_branch
      %121 = sbr.rel (0) target = $region53
    $region52: #{tpu_custom_call.1} parent=1 // pred_region
      %122 = dma.done [#allocation8], 384
    $region53: #{tpu_custom_call.1} parent=1 // pred_fallthru
      _
    // Predicated region
    $region54: #{tpu_custom_call.1} parent=1 // pred_check
      _
    $region55: #{tpu_custom_call.1} parent=1 // pred_check_branch
      %124 = sbr.rel (0) target = $region57
    $region56: #{tpu_custom_call.1} parent=1 // pred_region
      %125 = dma.done [#allocation8], 256
    $region57: #{tpu_custom_call.1} parent=1 // pred_fallthru
      _
    // Predicated region
    $region58: #{tpu_custom_call.1} parent=1 // pred_check
      _
    $region59: #{tpu_custom_call.1} parent=1 // pred_check_branch
      %127 = sbr.rel (0) target = $region61
    $region60: #{tpu_custom_call.1} parent=1 // pred_region
      %128 = dma.done [#allocation11], 1024
    $region61: #{tpu_custom_call.1} parent=1 // pred_fallthru
      _
    // Predicated region
    $region62: #{tpu_custom_call.1} parent=1 // pred_check
      _
    $region63: #{tpu_custom_call.1} parent=1 // pred_check_branch
      %130 = sbr.rel (0) target = $region65
    $region64: #{tpu_custom_call.1} parent=1 // pred_region
      %131 = dma.done [#allocation11], 4096
    $region65: #{tpu_custom_call.1} parent=1 // pred_fallthru
      _
    // Predicated region
    $region66: #{tpu_custom_call.1} parent=1 // pred_check
      _
    $region67: #{tpu_custom_call.1} parent=1 // pred_check_branch
      %133 = sbr.rel (0) target = $region69
    $region68: #{tpu_custom_call.1} parent=1 // pred_region
      %134 = dma.done [#allocation14], 4096
    $region69: #{tpu_custom_call.1} parent=1 // pred_fallthru
      _
    %v136 = vld [vmem:[%s8] sm:$0x1]
    %v137 = vld [vmem:[%s8 + $0x1] sm:$0x1]
    %v138 = vld [vmem:[%s8 + $0x2] sm:$0xf]
    %v139 = vld [vmem:[%s8 + $0x6] sm:$0x1]
    %v140 = vld [vmem:[%s8 + $0x7] sm:$0x1]
    %v141 = vld [vmem:[#allocation4] sm:$0xf]
    %v142 = vld [vmem:[#allocation7] sm:$0xf]
    %v143 = vld [vmem:[#allocation7 + $0x4] sm:$0xf]
    %v144 = vld [vmem:[#allocation7 + $0x8] sm:$0xf]
    %v145 = vld [vmem:[#allocation7 + $0xc] sm:$0xf]
    %v146 = vld [vmem:[#allocation7 + $0x10] sm:$0xf]
    %v147 = vld [vmem:[#allocation7 + $0x14] sm:$0xf]
    %v149 = vlaneseq
    %v150 = vshrl.u32 %v149, 7
    %v151 = vsub.s32 0, %v150
    %v152 = vrot.slane %v136, %v151
    %v160 = vunpack.c.l.b16 %v142
    %v161 = vunpack.c.l.b16 %v143
    %v162 = vunpack.c.l.b16 %v144
    %v163 = vunpack.c.l.b16 %v145
    %v164 = vunpack.c.l.b16 %v146
    %v165 = vunpack.c.l.b16 %v147
    %v166 = vpack.c.b16 %v161, %v160
    %v167 = vpack.c.b16 %v163, %v162
    %v168 = vpack.c.b16 %v165, %v164
    %vm172 = vcmask 392192
    %v174 = vsel %vm172, %v141, 0
    %176 = vmatprep.subr.bf16.mxu0 0
    %177 = vmatpush1.bf16.msra.mxu0 %v166
    %178 = vmatprep.subr.bf16.mxu0 0
    %179 = vmatpush1.bf16.msra.mxu0 %v167
    %180 = vmatprep.subr.bf16.mxu0 0
    %181 = vmatpush1.bf16.msra.mxu0 %v168
    %182 = vmatprep.subr.bf16.mxu0 0
    %183 = vmatpush1.bf16.msra.mxu0 0
    %184 = vmatprep.subr.bf16.mxu0 0
    %185 = vmatpush1.bf16.msra.mxu0 0
    %186 = vmatprep.subr.bf16.mxu0 0
    %187 = vmatpush1.bf16.msra.mxu0 0
    %188 = vmatprep.subr.bf16.mxu0 0
    %189 = vmatpush1.bf16.msra.mxu0 0
    %190 = vmatprep.subr.bf16.mxu0 0
    %191 = vmatpush1.bf16.msra.mxu0 0
    %192 = vmatprep.subr.bf16.mxu0 0
    %193 = vmatpush1.bf16.msra.mxu0 0
    %194 = vmatprep.subr.bf16.mxu0 0
    %195 = vmatpush1.bf16.msra.mxu0 0
    %196 = vmatprep.subr.bf16.mxu0 0
    %197 = vmatpush1.bf16.msra.mxu0 0
    %198 = vmatprep.subr.bf16.mxu0 0
    %199 = vmatpush1.bf16.msra.mxu0 0
    %200 = vmatprep.subr.bf16.mxu0 0
    %201 = vmatpush1.bf16.msra.mxu0 0
    %202 = vmatprep.subr.bf16.mxu0 0
    %203 = vmatpush1.bf16.msra.mxu0 0
    %204 = vmatprep.subr.bf16.mxu0 0
    %205 = vmatpush1.bf16.msra.mxu0 0
    %206 = vmatprep.subr.bf16.mxu0 0
    %207 = vmatpush1.bf16.msra.mxu0 0
    %208 = vmatprep.mubr.bf16.mxu0 0
    %209 = vmatmul.mubr.bf16.gmra.mrb[0].mxu0 %v174
    %v210 = vpop.f32.mrb[0].mxu0
    %v211 = vadd.f32 %v152, %v210
    %v212 = vpop.f32.mrb[0].mxu0
    %v213 = vpop.f32.mrb[0].mxu0
    %v214 = vpop.f32.mrb[0].mxu0
    %215 = vdwg.mxu0
    %v216 = vmax.f32 %v211, 0.0
    %v217 = vld [vmem:[#allocation2] sm:$0xf]
    %v218 = vld [vmem:[#allocation9] sm:$0xf]
    %v219 = vld [vmem:[#allocation9 + $0x4] sm:$0xf]
    %v220 = vld [vmem:[#allocation9 + $0x8] sm:$0xf]
    %v221 = vld [vmem:[#allocation9 + $0xc] sm:$0x7]
    %v222 = vpack.c.bf16 %v216, %v216
    %v223 = vld [vmem:[#allocation10] sm:$0xf]
    %v224 = vld [vmem:[#allocation10 + $0x4] sm:$0xf]
    %v225 = vld [vmem:[#allocation10 + $0x8] sm:$0xf]
    %v226 = vld [vmem:[#allocation10 + $0xc] sm:$0xf]
    %v227 = vld [vmem:[#allocation10 + $0x10] sm:$0xf]
    %v228 = vld [vmem:[#allocation10 + $0x14] sm:$0xf]
    %v229 = vld [vmem:[#allocation10 + $0x18] sm:$0xf]
    %v230 = vld [vmem:[#allocation10 + $0x1c] sm:$0xf]
    %v231 = vld [vmem:[#allocation10 + $0x20] sm:$0xf]
    %v232 = vld [vmem:[#allocation10 + $0x24] sm:$0xf]
    %v233 = vld [vmem:[#allocation10 + $0x28] sm:$0xf]
    %v234 = vld [vmem:[#allocation10 + $0x2c] sm:$0xf]
    %v235 = vld [vmem:[#allocation10 + $0x30] sm:$0xf]
    %v236 = vld [vmem:[#allocation10 + $0x34] sm:$0xf]
    %v237 = vld [vmem:[#allocation10 + $0x38] sm:$0xf]
    %v238 = vld [vmem:[#allocation10 + $0x3c] sm:$0xf]
    %v255 = vunpack.c.l.b16 %v223
    %v256 = vunpack.c.l.b16 %v224
    %v257 = vunpack.c.l.b16 %v225
    %v258 = vunpack.c.l.b16 %v226
    %v259 = vunpack.c.l.b16 %v227
    %v260 = vunpack.c.l.b16 %v228
    %v261 = vunpack.c.l.b16 %v229
    %v262 = vunpack.c.l.b16 %v230
    %v263 = vunpack.c.l.b16 %v231
    %v264 = vunpack.c.l.b16 %v232
    %v265 = vunpack.c.l.b16 %v233
    %v266 = vunpack.c.l.b16 %v234
    %v267 = vunpack.c.l.b16 %v235
    %v268 = vunpack.c.l.b16 %v236
    %v269 = vunpack.c.l.b16 %v237
    %v270 = vunpack.c.l.b16 %v238
    %v271 = vpack.c.b16 %v256, %v255
    %v272 = vpack.c.b16 %v258, %v257
    %v273 = vpack.c.b16 %v260, %v259
    %v274 = vpack.c.b16 %v262, %v261
    %v275 = vpack.c.b16 %v264, %v263
    %v276 = vpack.c.b16 %v266, %v265
    %v277 = vpack.c.b16 %v268, %v267
    %v278 = vpack.c.b16 %v270, %v269
    %287 = vmatprep.subr.bf16.mxu0 0
    %288 = vmatpush1.bf16.msra.mxu0 %v271
    %289 = vmatprep.subr.bf16.mxu0 0
    %290 = vmatpush1.bf16.msra.mxu0 %v272
    %291 = vmatprep.subr.bf16.mxu0 0
    %292 = vmatpush1.bf16.msra.mxu0 %v273
    %293 = vmatprep.subr.bf16.mxu0 0
    %294 = vmatpush1.bf16.msra.mxu0 %v274
    %295 = vmatprep.subr.bf16.mxu0 0
    %296 = vmatpush1.bf16.msra.mxu0 %v275
    %297 = vmatprep.subr.bf16.mxu0 0
    %298 = vmatpush1.bf16.msra.mxu0 %v276
    %299 = vmatprep.subr.bf16.mxu0 0
    %300 = vmatpush1.bf16.msra.mxu0 %v277
    %301 = vmatprep.subr.bf16.mxu0 0
    %302 = vmatpush1.bf16.msra.mxu0 %v278
    %303 = vmatprep.subr.bf16.mxu0 0
    %304 = vmatpush1.bf16.msra.mxu0 0
    %305 = vmatprep.subr.bf16.mxu0 0
    %306 = vmatpush1.bf16.msra.mxu0 0
    %307 = vmatprep.subr.bf16.mxu0 0
    %308 = vmatpush1.bf16.msra.mxu0 0
    %309 = vmatprep.subr.bf16.mxu0 0
    %310 = vmatpush1.bf16.msra.mxu0 0
    %311 = vmatprep.subr.bf16.mxu0 0
    %312 = vmatpush1.bf16.msra.mxu0 0
    %313 = vmatprep.subr.bf16.mxu0 0
    %314 = vmatpush1.bf16.msra.mxu0 0
    %315 = vmatprep.subr.bf16.mxu0 0
    %316 = vmatpush1.bf16.msra.mxu0 0
    %317 = vmatprep.subr.bf16.mxu0 0
    %318 = vmatpush1.bf16.msra.mxu0 0
    %319 = vmatprep.mubr.bf16.mxu0 0
    %320 = vmatmul.mubr.bf16.gmra.mrb[0].mxu0 %v222
    %v321 = vpop.f32.mrb[0].mxu0
    %v322 = vadd.f32 0.0, %v321
    %v323 = vpop.f32.mrb[0].mxu0
    %v324 = vpop.f32.mrb[0].mxu0
    %v325 = vpop.f32.mrb[0].mxu0
    %326 = vdwg.mxu0
    %v331 = vunpack.c.l.b16 %v218
    %v332 = vunpack.c.l.b16 %v219
    %v333 = vunpack.c.l.b16 %v220
    %v334 = vunpack.c.l.b16 %v221
    %v335 = vpack.c.b16 %v332, %v331
    %v336 = vpack.c.b16 %v334, %v333
    %vm338 = vcmask 244736
    %v340 = vsel %vm338, %v217, 0
    %vm342 = vcmask 1046528
    %v344 = vsel %vm342, %v336, 0
    %346 = vmatprep.subr.bf16.mxu0 0
    %347 = vmatpush1.bf16.msra.mxu0 %v335
    %348 = vmatprep.subr.bf16.mxu0 0
    %349 = vmatpush1.bf16.msra.mxu0 %v344
    %350 = vmatprep.subr.bf16.mxu0 0
    %351 = vmatpush1.bf16.msra.mxu0 0
    %352 = vmatprep.subr.bf16.mxu0 0
    %353 = vmatpush1.bf16.msra.mxu0 0
    %354 = vmatprep.subr.bf16.mxu0 0
    %355 = vmatpush1.bf16.msra.mxu0 0
    %356 = vmatprep.subr.bf16.mxu0 0
    %357 = vmatpush1.bf16.msra.mxu0 0
    %358 = vmatprep.subr.bf16.mxu0 0
    %359 = vmatpush1.bf16.msra.mxu0 0
    %360 = vmatprep.subr.bf16.mxu0 0
    %361 = vmatpush1.bf16.msra.mxu0 0
    %362 = vmatprep.subr.bf16.mxu0 0
    %363 = vmatpush1.bf16.msra.mxu0 0
    %364 = vmatprep.subr.bf16.mxu0 0
    %365 = vmatpush1.bf16.msra.mxu0 0
    %366 = vmatprep.subr.bf16.mxu0 0
    %367 = vmatpush1.bf16.msra.mxu0 0
    %368 = vmatprep.subr.bf16.mxu0 0
    %369 = vmatpush1.bf16.msra.mxu0 0
    %370 = vmatprep.subr.bf16.mxu0 0
    %371 = vmatpush1.bf16.msra.mxu0 0
    %372 = vmatprep.subr.bf16.mxu0 0
    %373 = vmatpush1.bf16.msra.mxu0 0
    %374 = vmatprep.subr.bf16.mxu0 0
    %375 = vmatpush1.bf16.msra.mxu0 0
    %376 = vmatprep.subr.bf16.mxu0 0
    %377 = vmatpush1.bf16.msra.mxu0 0
    %378 = vmatprep.mubr.bf16.mxu0 0
    %379 = vmatmul.mubr.bf16.gmra.mrb[0].mxu0 %v340
    %v380 = vpop.f32.mrb[0].mxu0
    %v381 = vadd.f32 %v322, %v380
    %v382 = vpop.f32.mrb[0].mxu0
    %v383 = vpop.f32.mrb[0].mxu0
    %v384 = vpop.f32.mrb[0].mxu0
    %385 = vdwg.mxu0
    %v387 = vlaneseq
    %v388 = vshrl.u32 %v387, 7
    %v389 = vsub.s32 0, %v388
    %v390 = vrot.slane %v137, %v389
    %v392 = vadd.f32 %v381, %v390
    %v393 = vmax.f32 %v392, 0.0
    %v394 = vld [vmem:[#allocation6] sm:$0xff]
    %v395 = vpack.c.bf16 %v394, %v394
    %v396 = vld [vmem:[#allocation6 + $0x8] sm:$0xff]
    %v397 = vpack.c.bf16 %v393, %v393
    %v398 = vld [vmem:[#allocation12] sm:$0xff]
    %v399 = vld [vmem:[#allocation12 + $0x8] sm:$0xff]
    %v400 = vld [vmem:[#allocation12 + $0x10] sm:$0xff]
    %v401 = vld [vmem:[#allocation12 + $0x18] sm:$0xff]
    %v402 = vld [vmem:[#allocation12 + $0x20] sm:$0xff]
    %v403 = vld [vmem:[#allocation12 + $0x28] sm:$0xff]
    %v404 = vld [vmem:[#allocation12 + $0x30] sm:$0xff]
    %v405 = vld [vmem:[#allocation12 + $0x38] sm:$0xff]
    %v406 = vld [vmem:[#allocation12 + $0x40] sm:$0xff]
    %v407 = vld [vmem:[#allocation12 + $0x48] sm:$0xff]
    %v408 = vld [vmem:[#allocation12 + $0x50] sm:$0xff]
    %v409 = vld [vmem:[#allocation12 + $0x58] sm:$0xff]
    %v410 = vld [vmem:[#allocation12 + $0x60] sm:$0xff]
    %v411 = vld [vmem:[#allocation12 + $0x68] sm:$0xff]
    %v412 = vld [vmem:[#allocation12 + $0x70] sm:$0xff]
    %v413 = vld [vmem:[#allocation12 + $0x78] sm:$0xff]
    %v414 = vld [vmem:[#allocation12 + $0x80] sm:$0xff]
    %v415 = vld [vmem:[#allocation12 + $0x88] sm:$0xff]
    %v416 = vld [vmem:[#allocation12 + $0x90] sm:$0xff]
    %v417 = vld [vmem:[#allocation12 + $0x98] sm:$0xff]
    %v418 = vld [vmem:[#allocation12 + $0xa0] sm:$0xff]
    %v419 = vld [vmem:[#allocation12 + $0xa8] sm:$0xff]
    %v420 = vld [vmem:[#allocation12 + $0xb0] sm:$0xff]
    %v421 = vld [vmem:[#allocation12 + $0xb8] sm:$0xff]
    %v422 = vld [vmem:[#allocation12 + $0xc0] sm:$0xff]
    %v423 = vld [vmem:[#allocation12 + $0xc8] sm:$0xff]
    %v424 = vld [vmem:[#allocation12 + $0xd0] sm:$0xff]
    %v425 = vld [vmem:[#allocation12 + $0xd8] sm:$0xff]
    %v426 = vld [vmem:[#allocation12 + $0xe0] sm:$0xff]
    %v427 = vld [vmem:[#allocation12 + $0xe8] sm:$0xff]
    %v428 = vld [vmem:[#allocation12 + $0xf0] sm:$0xff]
    %v429 = vld [vmem:[#allocation12 + $0xf8] sm:$0xff]
    %v430 = vld [vmem:[#allocation13] sm:$0xff]
    %v431 = vld [vmem:[#allocation13 + $0x8] sm:$0xff]
    %v432 = vld [vmem:[#allocation13 + $0x10] sm:$0xff]
    %v433 = vld [vmem:[#allocation13 + $0x18] sm:$0xff]
    %v434 = vld [vmem:[#allocation13 + $0x20] sm:$0xff]
    %v435 = vld [vmem:[#allocation13 + $0x28] sm:$0xff]
    %v436 = vld [vmem:[#allocation13 + $0x30] sm:$0xff]
    %v437 = vld [vmem:[#allocation13 + $0x38] sm:$0xff]
    %v438 = vld [vmem:[#allocation13 + $0x40] sm:$0xff]
    %v439 = vld [vmem:[#allocation13 + $0x48] sm:$0xff]
    %v440 = vld [vmem:[#allocation13 + $0x50] sm:$0xff]
    %v441 = vld [vmem:[#allocation13 + $0x58] sm:$0xff]
    %v442 = vld [vmem:[#allocation13 + $0x60] sm:$0xff]
    %v443 = vld [vmem:[#allocation13 + $0x68] sm:$0xff]
    %v444 = vld [vmem:[#allocation13 + $0x70] sm:$0xff]
    %v445 = vld [vmem:[#allocation13 + $0x78] sm:$0xff]
    %v446 = vld [vmem:[#allocation13 + $0x80] sm:$0xff]
    %v447 = vld [vmem:[#allocation13 + $0x88] sm:$0xff]
    %v448 = vld [vmem:[#allocation13 + $0x90] sm:$0xff]
    %v449 = vld [vmem:[#allocation13 + $0x98] sm:$0xff]
    %v450 = vld [vmem:[#allocation13 + $0xa0] sm:$0xff]
    %v451 = vld [vmem:[#allocation13 + $0xa8] sm:$0xff]
    %v452 = vld [vmem:[#allocation13 + $0xb0] sm:$0xff]
    %v453 = vld [vmem:[#allocation13 + $0xb8] sm:$0xff]
    %v454 = vld [vmem:[#allocation13 + $0xc0] sm:$0xff]
    %v455 = vld [vmem:[#allocation13 + $0xc8] sm:$0xff]
    %v456 = vld [vmem:[#allocation13 + $0xd0] sm:$0xff]
    %v457 = vld [vmem:[#allocation13 + $0xd8] sm:$0xff]
    %v458 = vld [vmem:[#allocation13 + $0xe0] sm:$0xff]
    %v459 = vld [vmem:[#allocation13 + $0xe8] sm:$0xff]
    %v460 = vld [vmem:[#allocation13 + $0xf0] sm:$0xff]
    %v461 = vld [vmem:[#allocation13 + $0xf8] sm:$0xff]
    %v494 = vunpack.c.l.b16 %v430
    %v495 = vunpack.c.h.b16 %v430
    %v496 = vunpack.c.l.b16 %v431
    %v497 = vunpack.c.h.b16 %v431
    %v498 = vunpack.c.l.b16 %v432
    %v499 = vunpack.c.h.b16 %v432
    %v500 = vunpack.c.l.b16 %v433
    %v501 = vunpack.c.h.b16 %v433
    %v502 = vunpack.c.l.b16 %v434
    %v503 = vunpack.c.h.b16 %v434
    %v504 = vunpack.c.l.b16 %v435
    %v505 = vunpack.c.h.b16 %v435
    %v506 = vunpack.c.l.b16 %v436
    %v507 = vunpack.c.h.b16 %v436
    %v508 = vunpack.c.l.b16 %v437
    %v509 = vunpack.c.h.b16 %v437
    %v510 = vunpack.c.l.b16 %v438
    %v511 = vunpack.c.h.b16 %v438
    %v512 = vunpack.c.l.b16 %v439
    %v513 = vunpack.c.h.b16 %v439
    %v514 = vunpack.c.l.b16 %v440
    %v515 = vunpack.c.h.b16 %v440
    %v516 = vunpack.c.l.b16 %v441
    %v517 = vunpack.c.h.b16 %v441
    %v518 = vunpack.c.l.b16 %v442
    %v519 = vunpack.c.h.b16 %v442
    %v520 = vunpack.c.l.b16 %v443
    %v521 = vunpack.c.h.b16 %v443
    %v522 = vunpack.c.l.b16 %v444
    %v523 = vunpack.c.h.b16 %v444
    %v524 = vunpack.c.l.b16 %v445
    %v525 = vunpack.c.h.b16 %v445
    %v526 = vunpack.c.l.b16 %v446
    %v527 = vunpack.c.h.b16 %v446
    %v528 = vunpack.c.l.b16 %v447
    %v529 = vunpack.c.h.b16 %v447
    %v530 = vunpack.c.l.b16 %v448
    %v531 = vunpack.c.h.b16 %v448
    %v532 = vunpack.c.l.b16 %v449
    %v533 = vunpack.c.h.b16 %v449
    %v534 = vunpack.c.l.b16 %v450
    %v535 = vunpack.c.h.b16 %v450
    %v536 = vunpack.c.l.b16 %v451
    %v537 = vunpack.c.h.b16 %v451
    %v538 = vunpack.c.l.b16 %v452
    %v539 = vunpack.c.h.b16 %v452
    %v540 = vunpack.c.l.b16 %v453
    %v541 = vunpack.c.h.b16 %v453
    %v542 = vunpack.c.l.b16 %v454
    %v543 = vunpack.c.h.b16 %v454
    %v544 = vunpack.c.l.b16 %v455
    %v545 = vunpack.c.h.b16 %v455
    %v546 = vunpack.c.l.b16 %v456
    %v547 = vunpack.c.h.b16 %v456
    %v548 = vunpack.c.l.b16 %v457
    %v549 = vunpack.c.h.b16 %v457
    %v550 = vunpack.c.l.b16 %v458
    %v551 = vunpack.c.h.b16 %v458
    %v552 = vunpack.c.l.b16 %v459
    %v553 = vunpack.c.h.b16 %v459
    %v554 = vunpack.c.l.b16 %v460
    %v555 = vunpack.c.h.b16 %v460
    %v556 = vunpack.c.l.b16 %v461
    %v557 = vunpack.c.h.b16 %v461
    %v558 = vpack.c.b16 %v498, %v494
    %v559 = vpack.c.b16 %v499, %v495
    %v560 = vpack.c.b16 %v500, %v496
    %v561 = vpack.c.b16 %v501, %v497
    %v562 = vpack.c.b16 %v506, %v502
    %v563 = vpack.c.b16 %v507, %v503
    %v564 = vpack.c.b16 %v508, %v504
    %v565 = vpack.c.b16 %v509, %v505
    %v566 = vpack.c.b16 %v514, %v510
    %v567 = vpack.c.b16 %v515, %v511
    %v568 = vpack.c.b16 %v516, %v512
    %v569 = vpack.c.b16 %v517, %v513
    %v570 = vpack.c.b16 %v522, %v518
    %v571 = vpack.c.b16 %v523, %v519
    %v572 = vpack.c.b16 %v524, %v520
    %v573 = vpack.c.b16 %v525, %v521
    %v574 = vpack.c.b16 %v530, %v526
    %v575 = vpack.c.b16 %v531, %v527
    %v576 = vpack.c.b16 %v532, %v528
    %v577 = vpack.c.b16 %v533, %v529
    %v578 = vpack.c.b16 %v538, %v534
    %v579 = vpack.c.b16 %v539, %v535
    %v580 = vpack.c.b16 %v540, %v536
    %v581 = vpack.c.b16 %v541, %v537
    %v582 = vpack.c.b16 %v546, %v542
    %v583 = vpack.c.b16 %v547, %v543
    %v584 = vpack.c.b16 %v548, %v544
    %v585 = vpack.c.b16 %v549, %v545
    %v586 = vpack.c.b16 %v554, %v550
    %v587 = vpack.c.b16 %v555, %v551
    %v588 = vpack.c.b16 %v556, %v552
    %v589 = vpack.c.b16 %v557, %v553
    %622 = vmatprep.subr.bf16.mxu0 %v559
    %623 = vmatpush1.bf16.msra.mxu0 %v558
    %624 = vmatprep.subr.bf16.mxu0 %v563
    %625 = vmatpush1.bf16.msra.mxu0 %v562
    %626 = vmatprep.subr.bf16.mxu0 %v567
    %627 = vmatpush1.bf16.msra.mxu0 %v566
    %628 = vmatprep.subr.bf16.mxu0 %v571
    %629 = vmatpush1.bf16.msra.mxu0 %v570
    %630 = vmatprep.subr.bf16.mxu0 %v575
    %631 = vmatpush1.bf16.msra.mxu0 %v574
    %632 = vmatprep.subr.bf16.mxu0 %v579
    %633 = vmatpush1.bf16.msra.mxu0 %v578
    %634 = vmatprep.subr.bf16.mxu0 %v583
    %635 = vmatpush1.bf16.msra.mxu0 %v582
    %636 = vmatprep.subr.bf16.mxu0 %v587
    %637 = vmatpush1.bf16.msra.mxu0 %v586
    %638 = vmatprep.subr.bf16.mxu0 0
    %639 = vmatpush1.bf16.msra.mxu0 0
    %640 = vmatprep.subr.bf16.mxu0 0
    %641 = vmatpush1.bf16.msra.mxu0 0
    %642 = vmatprep.subr.bf16.mxu0 0
    %643 = vmatpush1.bf16.msra.mxu0 0
    %644 = vmatprep.subr.bf16.mxu0 0
    %645 = vmatpush1.bf16.msra.mxu0 0
    %646 = vmatprep.subr.bf16.mxu0 0
    %647 = vmatpush1.bf16.msra.mxu0 0
    %648 = vmatprep.subr.bf16.mxu0 0
    %649 = vmatpush1.bf16.msra.mxu0 0
    %650 = vmatprep.subr.bf16.mxu0 0
    %651 = vmatpush1.bf16.msra.mxu0 0
    %652 = vmatprep.subr.bf16.mxu0 0
    %653 = vmatpush1.bf16.msra.mxu0 0
    %654 = vmatprep.mubr.bf16.mxu0 0
    %655 = vmatmul.mubr.bf16.gmra.mrb[0].mxu0 %v395
    %v656 = vpop.f32.mrb[0].mxu0
    %v657 = vadd.f32 0.0, %v656
    %v658 = vpop.f32.mrb[0].mxu0
    %v659 = vadd.f32 0.0, %v658
    %v660 = vpop.f32.mrb[0].mxu0
    %v661 = vpop.f32.mrb[0].mxu0
    %662 = vdwg.mxu0
    %663 = vmatprep.subr.bf16.mxu0 %v561
    %664 = vmatpush1.bf16.msra.mxu0 %v560
    %665 = vmatprep.subr.bf16.mxu0 %v565
    %666 = vmatpush1.bf16.msra.mxu0 %v564
    %667 = vmatprep.subr.bf16.mxu0 %v569
    %668 = vmatpush1.bf16.msra.mxu0 %v568
    %669 = vmatprep.subr.bf16.mxu0 %v573
    %670 = vmatpush1.bf16.msra.mxu0 %v572
    %671 = vmatprep.subr.bf16.mxu0 %v577
    %672 = vmatpush1.bf16.msra.mxu0 %v576
    %673 = vmatprep.subr.bf16.mxu0 %v581
    %674 = vmatpush1.bf16.msra.mxu0 %v580
    %675 = vmatprep.subr.bf16.mxu0 %v585
    %676 = vmatpush1.bf16.msra.mxu0 %v584
    %677 = vmatprep.subr.bf16.mxu0 %v589
    %678 = vmatpush1.bf16.msra.mxu0 %v588
    %679 = vmatprep.subr.bf16.mxu0 0
    %680 = vmatpush1.bf16.msra.mxu0 0
    %681 = vmatprep.subr.bf16.mxu0 0
    %682 = vmatpush1.bf16.msra.mxu0 0
    %683 = vmatprep.subr.bf16.mxu0 0
    %684 = vmatpush1.bf16.msra.mxu0 0
    %685 = vmatprep.subr.bf16.mxu0 0
    %686 = vmatpush1.bf16.msra.mxu0 0
    %687 = vmatprep.subr.bf16.mxu0 0
    %688 = vmatpush1.bf16.msra.mxu0 0
    %689 = vmatprep.subr.bf16.mxu0 0
    %690 = vmatpush1.bf16.msra.mxu0 0
    %691 = vmatprep.subr.bf16.mxu0 0
    %692 = vmatpush1.bf16.msra.mxu0 0
    %693 = vmatprep.subr.bf16.mxu0 0
    %694 = vmatpush1.bf16.msra.mxu0 0
    %695 = vmatprep.mubr.bf16.mxu0 0
    %696 = vmatmul.mubr.bf16.gmra.mrb[0].mxu0 %v395
    %v697 = vpop.f32.mrb[0].mxu0
    %v698 = vadd.f32 0.0, %v697
    %v699 = vpop.f32.mrb[0].mxu0
    %v700 = vadd.f32 0.0, %v699
    %v701 = vpop.f32.mrb[0].mxu0
    %v702 = vpop.f32.mrb[0].mxu0
    %703 = vdwg.mxu0
    %v736 = vunpack.c.l.b16 %v398
    %v737 = vunpack.c.h.b16 %v398
    %v738 = vunpack.c.l.b16 %v399
    %v739 = vunpack.c.h.b16 %v399
    %v740 = vunpack.c.l.b16 %v400
    %v741 = vunpack.c.h.b16 %v400
    %v742 = vunpack.c.l.b16 %v401
    %v743 = vunpack.c.h.b16 %v401
    %v744 = vunpack.c.l.b16 %v402
    %v745 = vunpack.c.h.b16 %v402
    %v746 = vunpack.c.l.b16 %v403
    %v747 = vunpack.c.h.b16 %v403
    %v748 = vunpack.c.l.b16 %v404
    %v749 = vunpack.c.h.b16 %v404
    %v750 = vunpack.c.l.b16 %v405
    %v751 = vunpack.c.h.b16 %v405
    %v752 = vunpack.c.l.b16 %v406
    %v753 = vunpack.c.h.b16 %v406
    %v754 = vunpack.c.l.b16 %v407
    %v755 = vunpack.c.h.b16 %v407
    %v756 = vunpack.c.l.b16 %v408
    %v757 = vunpack.c.h.b16 %v408
    %v758 = vunpack.c.l.b16 %v409
    %v759 = vunpack.c.h.b16 %v409
    %v760 = vunpack.c.l.b16 %v410
    %v761 = vunpack.c.h.b16 %v410
    %v762 = vunpack.c.l.b16 %v411
    %v763 = vunpack.c.h.b16 %v411
    %v764 = vunpack.c.l.b16 %v412
    %v765 = vunpack.c.h.b16 %v412
    %v766 = vunpack.c.l.b16 %v413
    %v767 = vunpack.c.h.b16 %v413
    %v768 = vunpack.c.l.b16 %v414
    %v769 = vunpack.c.h.b16 %v414
    %v770 = vunpack.c.l.b16 %v415
    %v771 = vunpack.c.h.b16 %v415
    %v772 = vunpack.c.l.b16 %v416
    %v773 = vunpack.c.h.b16 %v416
    %v774 = vunpack.c.l.b16 %v417
    %v775 = vunpack.c.h.b16 %v417
    %v776 = vunpack.c.l.b16 %v418
    %v777 = vunpack.c.h.b16 %v418
    %v778 = vunpack.c.l.b16 %v419
    %v779 = vunpack.c.h.b16 %v419
    %v780 = vunpack.c.l.b16 %v420
    %v781 = vunpack.c.h.b16 %v420
    %v782 = vunpack.c.l.b16 %v421
    %v783 = vunpack.c.h.b16 %v421
    %v784 = vunpack.c.l.b16 %v422
    %v785 = vunpack.c.h.b16 %v422
    %v786 = vunpack.c.l.b16 %v423
    %v787 = vunpack.c.h.b16 %v423
    %v788 = vunpack.c.l.b16 %v424
    %v789 = vunpack.c.h.b16 %v424
    %v790 = vunpack.c.l.b16 %v425
    %v791 = vunpack.c.h.b16 %v425
    %v792 = vunpack.c.l.b16 %v426
    %v793 = vunpack.c.h.b16 %v426
    %v794 = vunpack.c.l.b16 %v427
    %v795 = vunpack.c.h.b16 %v427
    %v796 = vunpack.c.l.b16 %v428
    %v797 = vunpack.c.h.b16 %v428
    %v798 = vunpack.c.l.b16 %v429
    %v799 = vunpack.c.h.b16 %v429
    %v800 = vpack.c.b16 %v740, %v736
    %v801 = vpack.c.b16 %v741, %v737
    %v802 = vpack.c.b16 %v742, %v738
    %v803 = vpack.c.b16 %v743, %v739
    %v804 = vpack.c.b16 %v748, %v744
    %v805 = vpack.c.b16 %v749, %v745
    %v806 = vpack.c.b16 %v750, %v746
    %v807 = vpack.c.b16 %v751, %v747
    %v808 = vpack.c.b16 %v756, %v752
    %v809 = vpack.c.b16 %v757, %v753
    %v810 = vpack.c.b16 %v758, %v754
    %v811 = vpack.c.b16 %v759, %v755
    %v812 = vpack.c.b16 %v764, %v760
    %v813 = vpack.c.b16 %v765, %v761
    %v814 = vpack.c.b16 %v766, %v762
    %v815 = vpack.c.b16 %v767, %v763
    %v816 = vpack.c.b16 %v772, %v768
    %v817 = vpack.c.b16 %v773, %v769
    %v818 = vpack.c.b16 %v774, %v770
    %v819 = vpack.c.b16 %v775, %v771
    %v820 = vpack.c.b16 %v780, %v776
    %v821 = vpack.c.b16 %v781, %v777
    %v822 = vpack.c.b16 %v782, %v778
    %v823 = vpack.c.b16 %v783, %v779
    %v824 = vpack.c.b16 %v788, %v784
    %v825 = vpack.c.b16 %v789, %v785
    %v826 = vpack.c.b16 %v790, %v786
    %v827 = vpack.c.b16 %v791, %v787
    %v828 = vpack.c.b16 %v796, %v792
    %v829 = vpack.c.b16 %v797, %v793
    %v830 = vpack.c.b16 %v798, %v794
    %v831 = vpack.c.b16 %v799, %v795
    %864 = vmatprep.subr.bf16.mxu0 %v801
    %865 = vmatpush1.bf16.msra.mxu0 %v800
    %866 = vmatprep.subr.bf16.mxu0 %v805
    %867 = vmatpush1.bf16.msra.mxu0 %v804
    %868 = vmatprep.subr.bf16.mxu0 %v809
    %869 = vmatpush1.bf16.msra.mxu0 %v808
    %870 = vmatprep.subr.bf16.mxu0 %v813
    %871 = vmatpush1.bf16.msra.mxu0 %v812
    %872 = vmatprep.subr.bf16.mxu0 %v817
    %873 = vmatpush1.bf16.msra.mxu0 %v816
    %874 = vmatprep.subr.bf16.mxu0 %v821
    %875 = vmatpush1.bf16.msra.mxu0 %v820
    %876 = vmatprep.subr.bf16.mxu0 %v825
    %877 = vmatpush1.bf16.msra.mxu0 %v824
    %878 = vmatprep.subr.bf16.mxu0 %v829
    %879 = vmatpush1.bf16.msra.mxu0 %v828
    %880 = vmatprep.subr.bf16.mxu0 0
    %881 = vmatpush1.bf16.msra.mxu0 0
    %882 = vmatprep.subr.bf16.mxu0 0
    %883 = vmatpush1.bf16.msra.mxu0 0
    %884 = vmatprep.subr.bf16.mxu0 0
    %885 = vmatpush1.bf16.msra.mxu0 0
    %886 = vmatprep.subr.bf16.mxu0 0
    %887 = vmatpush1.bf16.msra.mxu0 0
    %888 = vmatprep.subr.bf16.mxu0 0
    %889 = vmatpush1.bf16.msra.mxu0 0
    %890 = vmatprep.subr.bf16.mxu0 0
    %891 = vmatpush1.bf16.msra.mxu0 0
    %892 = vmatprep.subr.bf16.mxu0 0
    %893 = vmatpush1.bf16.msra.mxu0 0
    %894 = vmatprep.subr.bf16.mxu0 0
    %895 = vmatpush1.bf16.msra.mxu0 0
    %896 = vmatprep.mubr.bf16.mxu0 0
    %897 = vmatmul.mubr.bf16.gmra.mrb[0].mxu0 %v397
    %v898 = vpop.f32.mrb[0].mxu0
    %v899 = vadd.f32 %v657, %v898
    %v900 = vpop.f32.mrb[0].mxu0
    %v901 = vadd.f32 %v659, %v900
    %v902 = vpop.f32.mrb[0].mxu0
    %v903 = vpop.f32.mrb[0].mxu0
    %904 = vdwg.mxu0
    %905 = vmatprep.subr.bf16.mxu0 %v803
    %906 = vmatpush1.bf16.msra.mxu0 %v802
    %907 = vmatprep.subr.bf16.mxu0 %v807
    %908 = vmatpush1.bf16.msra.mxu0 %v806
    %909 = vmatprep.subr.bf16.mxu0 %v811
    %910 = vmatpush1.bf16.msra.mxu0 %v810
    %911 = vmatprep.subr.bf16.mxu0 %v815
    %912 = vmatpush1.bf16.msra.mxu0 %v814
    %913 = vmatprep.subr.bf16.mxu0 %v819
    %914 = vmatpush1.bf16.msra.mxu0 %v818
    %915 = vmatprep.subr.bf16.mxu0 %v823
    %916 = vmatpush1.bf16.msra.mxu0 %v822
    %917 = vmatprep.subr.bf16.mxu0 %v827
    %918 = vmatpush1.bf16.msra.mxu0 %v826
    %919 = vmatprep.subr.bf16.mxu0 %v831
    %920 = vmatpush1.bf16.msra.mxu0 %v830
    %921 = vmatprep.subr.bf16.mxu0 0
    %922 = vmatpush1.bf16.msra.mxu0 0
    %923 = vmatprep.subr.bf16.mxu0 0
    %924 = vmatpush1.bf16.msra.mxu0 0
    %925 = vmatprep.subr.bf16.mxu0 0
    %926 = vmatpush1.bf16.msra.mxu0 0
    %927 = vmatprep.subr.bf16.mxu0 0
    %928 = vmatpush1.bf16.msra.mxu0 0
    %929 = vmatprep.subr.bf16.mxu0 0
    %930 = vmatpush1.bf16.msra.mxu0 0
    %931 = vmatprep.subr.bf16.mxu0 0
    %932 = vmatpush1.bf16.msra.mxu0 0
    %933 = vmatprep.subr.bf16.mxu0 0
    %934 = vmatpush1.bf16.msra.mxu0 0
    %935 = vmatprep.subr.bf16.mxu0 0
    %936 = vmatpush1.bf16.msra.mxu0 0
    %937 = vmatprep.mubr.bf16.mxu0 0
    %938 = vmatmul.mubr.bf16.gmra.mrb[0].mxu0 %v397
    %v939 = vpop.f32.mrb[0].mxu0
    %v940 = vadd.f32 %v698, %v939
    %v941 = vpop.f32.mrb[0].mxu0
    %v942 = vadd.f32 %v700, %v941
    %v943 = vpop.f32.mrb[0].mxu0
    %v944 = vpop.f32.mrb[0].mxu0
    %945 = vdwg.mxu0
    %v947 = vlaneseq
    %v948 = vshrl.u32 %v947, 7
    %v949 = vsub.s32 0, %v948
    %v950 = vrot.slane %v138, %v949
    %v951 = vlaneseq
    %v952 = vshrl.u32 %v951, 7
    %v953 = vsub.s32 1, %v952
    %v954 = vrot.slane %v138, %v953
    %v955 = vlaneseq
    %v956 = vshrl.u32 %v955, 7
    %v957 = vsub.s32 2, %v956
    %v958 = vrot.slane %v138, %v957
    %v959 = vlaneseq
    %v960 = vshrl.u32 %v959, 7
    %v961 = vsub.s32 3, %v960
    %v962 = vrot.slane %v138, %v961
    %v967 = vadd.f32 %v899, %v950
    %v968 = vadd.f32 %v901, %v954
    %v969 = vadd.f32 %v940, %v958
    %v970 = vadd.f32 %v942, %v962
    %v971 = vxor.u32 %v967, 2147483648
    %v972 = vmul.f32 %v971, 1.442695
    %v973 = vpow.pop %v972
    %v974 = vadd.f32 %v973, 1.0
    %v975 = vrcp.pop %v974
    %v976 = vmul.f32 1.0, %v975
    %v977 = vxor.u32 %v968, 2147483648
    %v978 = vmul.f32 %v977, 1.442695
    %v979 = vpow.pop %v978
    %v980 = vadd.f32 %v979, 1.0
    %v981 = vrcp.pop %v980
    %v982 = vmul.f32 1.0, %v981
    %v983 = vtanh.pop %v969
    %v984 = vxor.u32 %v970, 2147483648
    %v985 = vmul.f32 %v984, 1.442695
    %v986 = vpow.pop %v985
    %v987 = vadd.f32 %v986, 1.0
    %v988 = vrcp.pop %v987
    %v989 = vmul.f32 1.0, %v988
    %v990 = vmul.f32 %v982, %v396
    %v991 = vmul.f32 %v976, %v983
    %v992 = vadd.f32 %v990, %v991
    %v993 = vtanh.pop %v992
    %v994 = vmul.f32 %v989, %v993
    %v996 = vlaneseq
    %v997 = vshrl.u32 %v996, 7
    %v998 = vsub.s32 0, %v997
    %v999 = vrot.slane %v139, %v998
    %v1001 = vmul.f32 %v994, %v999
    %1002 = vadd.xlane.f32.xlu0 %v1001
    %v1003 = vpop.xlane.xlu0 %1002
    %v1005 = vlaneseq
    %v1006 = vshrl.u32 %v1005, 7
    %v1007 = vsub.s32 0, %v1006
    %v1008 = vrot.slane %v140, %v1007
    %v1010 = vadd.f32 %v1003, %v1008
    %vm1011 = vcmask 7168
    %1012 = vst.msk [vmem:[%s9] sm:$0xff] %vm1011, %v1010
    // Predicated region
    $region70: #{tpu_custom_call.1} parent=1 // pred_check
      _
    $region71: #{tpu_custom_call.1} parent=1 // pred_check_branch
      %1014 = sbr.rel (0) target = $region73
    $region72: #{tpu_custom_call.1} parent=1 // pred_region
      _
    $region73: #{tpu_custom_call.1} parent=1 // pred_fallthru
      _
    // Predicated region
    $region74: #{tpu_custom_call.1} parent=1 // pred_check
      _
    $region75: #{tpu_custom_call.1} parent=1 // pred_check_branch
      %1016 = sbr.rel (0) target = $region77
    $region76: #{tpu_custom_call.1} parent=1 // pred_region
      _
    $region77: #{tpu_custom_call.1} parent=1 // pred_fallthru
      _
    %1017 = vsyncpa [#allocation3], 1
    %1018 = vsyncpa [#allocation5], 1
    %1019 = vsyncpa [#allocation8], 1
    %1020 = vsyncpa [#allocation11], 1
    %1021 = vsyncpa [#allocation14], 1

</llo_original>
